<compile_context>
chip_gen: v7x
topology: tpu7x:2x2x1
jax: 0.10.0
libtpu: 0.0.40
codegen_flags: <defaults>
</compile_context>

<pallas_src>
import jax
import jax.numpy as jnp
import numpy as np
from jax import lax
from jax.experimental import pallas as pl
from jax.experimental.pallas import tpu as pltpu


def _round_up(x, m):
    return ((x + m - 1) // m) * m


def sample_attention_kernel(semb_ref, pemb_ref, oemb_ref, tk_ref, tq_ref,
                            bias_ref, u_ref, w_ref):
    """Per-tile attention dots + reservoir-sampling weights.

    semb/oemb : (E, TN)  matmul dtype (f32 or bf16), edges on lanes
    pemb      : (E, TN)  float32
    tk/tq     : (E, E)   matmul dtype (resident across the grid)
    bias/u    : (1, TN)  float32  (bias = sbias[si]+pbias[pi]+obias[oi]+gbias)
    w (out)   : (1, TN)  float32
    """
    # einsum('ij,nj->ni', tokeys, semb) in edge-on-lanes layout == tokeys @ semb_t
    sk = jnp.dot(tk_ref[...], semb_ref[...], preferred_element_type=jnp.float32)
    ok = jnp.dot(tq_ref[...], oemb_ref[...], preferred_element_type=jnp.float32)

    # (semb * pemb * oemb).sum over E  -> sublane reduce; result is lane-dense.
    dots = jnp.sum(sk * pemb_ref[...] * ok, axis=0, keepdims=True) + bias_ref[...]

    # weights = log(u) / sigmoid(dots) == log(u) * (1 + exp(-dots))   (no divide)
    w_ref[...] = jnp.log(u_ref[...]) * (1.0 + jnp.exp(-dots))


def sample_weights_pallas(semb_t, pemb_t, oemb_t, tokeys, toqueries, bias, u):
    """Reservoir-sampling weights for Np (padded) candidate edges.

    semb_t/pemb_t/oemb_t: (E, Np)   tokeys/toqueries: (E, E)
    bias/u: (G, tile_n) with G * tile_n == Np
    Returns lane-dense weights of shape (G, tile_n) float32.
    """
    E, Np = semb_t.shape
    G, tile_n = bias.shape
    assert G * tile_n == Np

    edge_spec = pl.BlockSpec((E, tile_n), lambda i: (0, i))
    row_spec = pl.BlockSpec((1, tile_n), lambda i: (i, 0))
    mat_spec = pl.BlockSpec((E, E), lambda i: (0, 0))

    return pl.pallas_call(
        sample_attention_kernel,
        out_shape=jax.ShapeDtypeStruct((G, tile_n), jnp.float32),
        grid_spec=pltpu.PrefetchScalarGridSpec(
            num_scalar_prefetch=0,
            grid=(G,),
            in_specs=[
                edge_spec,   # semb_t
                edge_spec,   # pemb_t (f32)
                edge_spec,   # oemb_t
                mat_spec,    # tokeys
                mat_spec,    # toqueries
                row_spec,    # folded bias (lane-dense)
                row_spec,    # u           (lane-dense)
            ],
            out_specs=row_spec,
        ),
        compiler_params=pltpu.CompilerParams(
            dimension_semantics=("parallel",)),   # splits across 2 TCs on v7x
    )(semb_t, pemb_t, oemb_t, tokeys, toqueries, bias, u)


def sample_forward(nodes, relations, tokeys, toqueries,
                   gbias, sbias, pbias, obias,
                   cflat, u, ksample, *, tile_n=512,
                   matmul_dtype=jnp.float32):
    """JAX glue mirroring the training branch of Sample.forward for one batch
    element: gather embeddings/biases, run the Pallas hot path, take top-k.

    matmul_dtype=jnp.bfloat16 is recommended on v6e/v7x; keep f32 on v5e.
    """
    si, pi, oi = cflat[:, 0], cflat[:, 1], cflat[:, 2]
    N = cflat.shape[0]

    # Tile / padding: edges padded to a lane-dense multiple of 128.
    tile_n = _round_up(tile_n, 128)
    tile = min(tile_n, _round_up(N, 128))
    Np = _round_up(N, tile)
    G = Np // tile
    pad = Np - N

    # Gather + transpose to the edge-on-lanes (E, N) layout. Layout plumbing
    # only; XLA fuses the transpose into the gathers.
    # TODO(synk): for large N, hoist these gathers into the kernel (scalar-
    # prefetched cflat + manual DMA row gather) to avoid materializing 3x(N,E)
    # gathered copies in HBM.
    semb_t = jnp.transpose(nodes[si, :]).astype(matmul_dtype)
    oemb_t = jnp.transpose(nodes[oi, :]).astype(matmul_dtype)
    pemb_t = jnp.transpose(relations[pi, :]).astype(jnp.float32)

    # Fold all four bias terms into one lane-dense stream (fuses into gathers).
    bias = (sbias[si] + pbias[pi] + obias[oi] + gbias).astype(jnp.float32)

    semb_t = jnp.pad(semb_t, ((0, 0), (0, pad)))
    oemb_t = jnp.pad(oemb_t, ((0, 0), (0, pad)))
    pemb_t = jnp.pad(pemb_t, ((0, 0), (0, pad)))
    bias = jnp.pad(bias, (0, pad)).reshape(G, tile)
    u_p = jnp.pad(u.astype(jnp.float32), (0, pad),
                  constant_values=0.5).reshape(G, tile)

    w = sample_weights_pallas(
        semb_t, pemb_t, oemb_t,
        tokeys.astype(matmul_dtype), toqueries.astype(matmul_dtype),
        bias, u_p)

    # Padded edges sit at the tail -> drop them before top-k (no -inf masking
    # needed).
    weights = w.reshape(Np)[:N]

    # torch.sort(descending=True)[:ksample]  ->  top-k by weight.
    # TODO(synk): the Batch graph bookkeeping (add_edges, nodesets/edgesets,
    # frind remapping) is host-side Python data-structure work, not a kernel.
    _, idx = lax.top_k(weights, ksample)
    cand_sampled = cflat[idx, :]
    return weights, cand_sampled


def reference_weights(semb, pemb, oemb, tokeys, toqueries, sb, pb, ob, gbias, u):
    sk = jnp.einsum('ij,nj->ni', tokeys, semb)
    ok = jnp.einsum('ij,nj->ni', toqueries, oemb)
    dots = (sk * pemb * ok).sum(-1) + sb + pb + ob + gbias
    return jnp.log(u) / jax.nn.sigmoid(dots)


if __name__ == "__main__":
    key = jax.random.PRNGKey(0)
    k = jax.random.split(key, 10)

    num_nodes = 16    # entities in the knowledge graph
    num_rels = 4      # relation types
    E = 32            # embedding dim (h; Sample requires emb == h)
    N = 64            # candidate incident edges for this batch element
    ksample = 16

    # Deterministic parameter init (shapes implied by Sample.__init__ / forward)
    nodes = jax.random.normal(k[0], (num_nodes, E), jnp.float32) * 0.1
    relations = jax.random.normal(k[1], (num_rels, E), jnp.float32) * 0.1
    tokeys = jax.random.normal(k[2], (E, E), jnp.float32) / np.sqrt(E)
    toqueries = jax.random.normal(k[3], (E, E), jnp.float32) / np.sqrt(E)
    gbias = jnp.zeros((), jnp.float32)
    sbias = jax.random.normal(k[4], (num_nodes,), jnp.float32) * 0.01
    pbias = jax.random.normal(k[5], (num_rels,), jnp.float32) * 0.01
    obias = jax.random.normal(k[6], (num_nodes,), jnp.float32) * 0.01

    # Candidate incident edges (s, p, o) as produced by batch.gen_inc_edges
    si = jax.random.randint(k[7], (N,), 0, num_nodes)
    pi = jax.random.randint(k[8], (N,), 0, num_rels)
    oi = jax.random.randint(k[9], (N,), 0, num_nodes)
    cflat = jnp.stack([si, pi, oi], axis=1).astype(jnp.int32)

    # torch.rand(*dots.size())
    u = jax.random.uniform(jax.random.PRNGKey(123), (N,), jnp.float32,
                           minval=1e-6, maxval=1.0)

    ref = reference_weights(nodes[si], relations[pi], nodes[oi],
                            tokeys, toqueries,
                            sbias[si], pbias[pi], obias[oi], gbias, u)

    # f32 matmul path (exact everywhere; recommended on v5e).
    weights, cand_sampled = sample_forward(
        nodes, relations, tokeys, toqueries,
        gbias, sbias, pbias, obias, cflat, u, ksample,
        matmul_dtype=jnp.float32)
    jax.block_until_ready((weights, cand_sampled))
    np.testing.assert_allclose(np.asarray(weights), np.asarray(ref),
                               rtol=1e-4, atol=1e-5)
    assert cand_sampled.shape == (ksample, 3)

    # bf16 matmul-input path (recommended on v6e / v7x); f32 accumulate + tail.
    weights_bf16, _ = sample_forward(
        nodes, relations, tokeys, toqueries,
        gbias, sbias, pbias, obias, cflat, u, ksample,
        matmul_dtype=jnp.bfloat16)
    jax.block_until_ready(weights_bf16)
    np.testing.assert_allclose(np.asarray(weights_bf16), np.asarray(ref),
                               rtol=2e-2, atol=2e-2)

    print("KERNEL_OK")
</pallas_src>

<mosaic_0001>
module attributes {stable_mosaic.version = 11 : i64} {
  func.func @sample_attention_kernel(%arg0: i32, %arg1: memref<32x128xf32, #tpu.memory_space<vmem>>, %arg2: memref<32x128xf32, #tpu.memory_space<vmem>>, %arg3: memref<32x128xf32, #tpu.memory_space<vmem>>, %arg4: memref<32x32xf32, #tpu.memory_space<vmem>>, %arg5: memref<32x32xf32, #tpu.memory_space<vmem>>, %arg6: memref<1x128xf32, #tpu.memory_space<vmem>>, %arg7: memref<1x128xf32, #tpu.memory_space<vmem>>, %arg8: memref<1x128xf32, #tpu.memory_space<vmem>>) attributes {dimension_semantics = [#tpu.dimension_semantics<parallel>], iteration_bounds = array<i64: 1>, scalar_prefetch = 0 : i64, scratch_operands = 0 : i64, tpu.core_type = #tpu.core_type<tc>, window_params = [{transform_indices = @transform_0, window_bounds = array<i64: 32, 128>}, {transform_indices = @transform_1, window_bounds = array<i64: 32, 128>}, {transform_indices = @transform_2, window_bounds = array<i64: 32, 128>}, {pipeline_mode = #tpu.pipeline_mode<synchronous>, transform_indices = @transform_3, window_bounds = array<i64: 32, 32>}, {pipeline_mode = #tpu.pipeline_mode<synchronous>, transform_indices = @transform_4, window_bounds = array<i64: 32, 32>}, {transform_indices = @transform_5, window_bounds = array<i64: 1, 128>}, {transform_indices = @transform_6, window_bounds = array<i64: 1, 128>}, {transform_indices = @transform_7, window_bounds = array<i64: 1, 128>}]} {
    %c0 = arith.constant 0 : index
    %c0_0 = arith.constant 0 : index
    %0 = vector.load %arg4[%c0, %c0_0] : memref<32x32xf32, #tpu.memory_space<vmem>>, vector<32x32xf32>
    %c0_1 = arith.constant 0 : index
    %c0_2 = arith.constant 0 : index
    %1 = vector.load %arg1[%c0_1, %c0_2] : memref<32x128xf32, #tpu.memory_space<vmem>>, vector<32x128xf32>
    %cst = arith.constant dense<0.000000e+00> : vector<32x128xf32>
    %2 = tpu.matmul %0, %1, %cst {dimension_numbers = #tpu.dot_dimension_numbers<[1], [0], [0], [1], [0, 0, 1, 1], [], []>} : vector<32x32xf32>, vector<32x128xf32>, vector<32x128xf32> -> vector<32x128xf32>
    %c0_3 = arith.constant 0 : index
    %c0_4 = arith.constant 0 : index
    %3 = vector.load %arg5[%c0_3, %c0_4] : memref<32x32xf32, #tpu.memory_space<vmem>>, vector<32x32xf32>
    %c0_5 = arith.constant 0 : index
    %c0_6 = arith.constant 0 : index
    %4 = vector.load %arg3[%c0_5, %c0_6] : memref<32x128xf32, #tpu.memory_space<vmem>>, vector<32x128xf32>
    %cst_7 = arith.constant dense<0.000000e+00> : vector<32x128xf32>
    %5 = tpu.matmul %3, %4, %cst_7 {dimension_numbers = #tpu.dot_dimension_numbers<[1], [0], [0], [1], [0, 0, 1, 1], [], []>} : vector<32x32xf32>, vector<32x128xf32>, vector<32x128xf32> -> vector<32x128xf32>
    %c0_8 = arith.constant 0 : index
    %c0_9 = arith.constant 0 : index
    %6 = vector.load %arg2[%c0_8, %c0_9] : memref<32x128xf32, #tpu.memory_space<vmem>>, vector<32x128xf32>
    %7 = arith.mulf %2, %6 : vector<32x128xf32>
    %8 = arith.mulf %7, %5 : vector<32x128xf32>
    %cst_10 = arith.constant dense<0.000000e+00> : vector<128xf32>
    %9 = vector.multi_reduction <add>, %8, %cst_10 [0] : vector<32x128xf32> to vector<128xf32>
    %10 = vector.shape_cast %9 : vector<128xf32> to vector<1x128xf32>
    %c0_11 = arith.constant 0 : index
    %c0_12 = arith.constant 0 : index
    %11 = vector.load %arg6[%c0_11, %c0_12] : memref<1x128xf32, #tpu.memory_space<vmem>>, vector<1x128xf32>
    %12 = arith.addf %10, %11 : vector<1x128xf32>
    %c0_13 = arith.constant 0 : index
    %c0_14 = arith.constant 0 : index
    %13 = vector.load %arg7[%c0_13, %c0_14] : memref<1x128xf32, #tpu.memory_space<vmem>>, vector<1x128xf32>
    %14 = math.log %13 : vector<1x128xf32>
    %cst_15 = arith.constant 0.000000e+00 : f32
    %15 = vector.broadcast %cst_15 : f32 to vector<1x128xf32>
    %16 = arith.subf %15, %12 : vector<1x128xf32>
    %17 = math.exp %16 : vector<1x128xf32>
    %cst_16 = arith.constant 1.000000e+00 : f32
    %18 = vector.broadcast %cst_16 : f32 to vector<1x128xf32>
    %19 = arith.addf %18, %17 : vector<1x128xf32>
    %20 = arith.mulf %14, %19 : vector<1x128xf32>
    %c0_17 = arith.constant 0 : index
    %c0_18 = arith.constant 0 : index
    %21 = vector.load %arg8[%c0_17, %c0_18] : memref<1x128xf32, #tpu.memory_space<vmem>>, vector<1x128xf32>
    tpu.vector_store %arg8[%c0_17, %c0_18], %20 {strides = array<i32>} : memref<1x128xf32, #tpu.memory_space<vmem>>, vector<1x128xf32>,
    return
  }
  func.func @transform_0(%arg0: i32) -> (i32, i32) {
    %c0_i32 = arith.constant 0 : i32
    %c0_i32_0 = arith.constant 0 : i32
    return %c0_i32, %arg0 : i32, i32
  }
  func.func @transform_1(%arg0: i32) -> (i32, i32) {
    %c0_i32 = arith.constant 0 : i32
    %c0_i32_0 = arith.constant 0 : i32
    return %c0_i32, %arg0 : i32, i32
  }
  func.func @transform_2(%arg0: i32) -> (i32, i32) {
    %c0_i32 = arith.constant 0 : i32
    %c0_i32_0 = arith.constant 0 : i32
    return %c0_i32, %arg0 : i32, i32
  }
  func.func @transform_3(%arg0: i32) -> (i32, i32) {
    %c0_i32 = arith.constant 0 : i32
    %c0_i32_0 = arith.constant 0 : i32
    %c0_i32_1 = arith.constant 0 : i32
    return %c0_i32, %c0_i32_0 : i32, i32
  }
  func.func @transform_4(%arg0: i32) -> (i32, i32) {
    %c0_i32 = arith.constant 0 : i32
    %c0_i32_0 = arith.constant 0 : i32
    %c0_i32_1 = arith.constant 0 : i32
    return %c0_i32, %c0_i32_0 : i32, i32
  }
  func.func @transform_5(%arg0: i32) -> (i32, i32) {
    %c0_i32 = arith.constant 0 : i32
    %c0_i32_0 = arith.constant 0 : i32
    return %arg0, %c0_i32 : i32, i32
  }
  func.func @transform_6(%arg0: i32) -> (i32, i32) {
    %c0_i32 = arith.constant 0 : i32
    %c0_i32_0 = arith.constant 0 : i32
    return %arg0, %c0_i32 : i32, i32
  }
  func.func @transform_7(%arg0: i32) -> (i32, i32) {
    %c0_i32 = arith.constant 0 : i32
    %c0_i32_0 = arith.constant 0 : i32
    return %arg0, %c0_i32 : i32, i32
  }
}

</mosaic_0001>

<llo_original>
// kernel: tpu_custom_call.1
$region0: #{tpu_custom_call.1}
  #allocation0 [shape = 'u32[]', space=smem, size = 0x4, offset = 0x4, fixed_abs, tag = 'smem constant byte address 0x4 - core index']
  #allocation1 [shape = 'u32[144,128]{1,0:T(1,128)}', space=vmem, size = 0x12000, scoped, tag = 'internal scratch']
  %s0 = inlined_call_operand.hbm [shape: f32[32,128], index: 0, kind: input, shape index: {}]
  %s1 = inlined_call_operand.hbm [shape: f32[32,128], index: 1, kind: input, shape index: {}]
  %s2 = inlined_call_operand.hbm [shape: f32[32,128], index: 2, kind: input, shape index: {}]
  %s3 = inlined_call_operand.hbm [shape: f32[32,32], index: 3, kind: input, shape index: {}]
  %s4 = inlined_call_operand.hbm [shape: f32[32,32], index: 4, kind: input, shape index: {}]
  %s5 = inlined_call_operand.vmem [shape: f32[1,128], index: 5, kind: input, shape index: {}]
  %s6 = inlined_call_operand.vmem [shape: f32[1,128], index: 6, kind: input, shape index: {}]
  %s7 = inlined_call_operand.hbm [shape: f32[1,128], index: 7, kind: output, shape index: {}]
  %s8 = sld [smem:[#allocation0]]
  $region58: #{tpu_custom_call.1} parent=0
    _
  %s10 = ssub.s32 1, %s8
  %s11 = scalar_select 0, %s10, %s8
  $region1: #{tpu_custom_call.1} parent=0
    #allocation2 [shape = 'u8[16384]{0}', space=vmem, size = 0x4000, scoped, tag = 'input window, operand 0, single buffered']
    #allocation3 [shape = 's32[1]{0}', space=sflag, size = 0x4, scoped, tag = 'scoped memory for tpu_custom_call.1']
    #allocation4 [shape = 's32[1]{0}', space=sflag, size = 0x4, scoped, tag = 'scoped memory for tpu_custom_call.1']
    #allocation5 [shape = 'u8[16384]{0}', space=vmem, size = 0x4000, scoped, tag = 'input window, operand 1, single buffered']
    #allocation6 [shape = 's32[1]{0}', space=sflag, size = 0x4, scoped, tag = 'scoped memory for tpu_custom_call.1']
    #allocation7 [shape = 'u8[16384]{0}', space=vmem, size = 0x4000, scoped, tag = 'input window, operand 2, single buffered']
    #allocation8 [shape = 'u8[16384]{0}', space=vmem, size = 0x4000, scoped, tag = 'input window, operand 3, single buffered']
    #allocation9 [shape = 's32[1]{0}', space=sflag, size = 0x4, scoped, tag = 'scoped memory for tpu_custom_call.1']
    #allocation10 [shape = 'u8[16384]{0}', space=vmem, size = 0x4000, scoped, tag = 'input window, operand 4, single buffered']
    #allocation11 [shape = 'u8[512]{0}', space=vmem, size = 0x400, scoped, tag = 'output window, operand 0, single buffered']
    %12 = vsyncpa [#allocation3], 0
    %13 = vsyncpa [#allocation6], 0
    %14 = vsyncpa [#allocation9], 0
    %15 = vsyncpa [#allocation4], 0
    // Predicated region
    $region2: #{tpu_custom_call.1} parent=1 // pred_check
      _
    $region3: #{tpu_custom_call.1} parent=1 // pred_check_branch
      %17 = sbr.rel (0) target = $region5
    $region4: #{tpu_custom_call.1} parent=1 // pred_region
      %s19 = ssub.s32 512, 512
      %20 = vsyncadd [#allocation3], %s19
      %s21 = sshll.u32 [#allocation2], 4
      %s22 = int_to_ptr.vmem [resolvable:$true] %s21
      %27 = dma.hbm_to_vmem [thread:$0]  %s0, 512, %s22, [#allocation3], 128, 128, 8
    $region5: #{tpu_custom_call.1} parent=1 // pred_fallthru
      _
    // Predicated region
    $region6: #{tpu_custom_call.1} parent=1 // pred_check
      _
    $region7: #{tpu_custom_call.1} parent=1 // pred_check_branch
      %29 = sbr.rel (0) target = $region9
    $region8: #{tpu_custom_call.1} parent=1 // pred_region
      %s31 = ssub.s32 512, 512
      %32 = vsyncadd [#allocation6], %s31
      %s33 = sshll.u32 [#allocation5], 4
      %s34 = int_to_ptr.vmem [resolvable:$true] %s33
      %39 = dma.hbm_to_vmem [thread:$0]  %s1, 512, %s34, [#allocation6], 128, 128, 8
    $region9: #{tpu_custom_call.1} parent=1 // pred_fallthru
      _
    // Predicated region
    $region10: #{tpu_custom_call.1} parent=1 // pred_check
      _
    $region11: #{tpu_custom_call.1} parent=1 // pred_check_branch
      %41 = sbr.rel (0) target = $region13
    $region12: #{tpu_custom_call.1} parent=1 // pred_region
      %s43 = ssub.s32 512, 512
      %44 = vsyncadd [#allocation6], %s43
      %s45 = sshll.u32 [#allocation7], 4
      %s46 = int_to_ptr.vmem [resolvable:$true] %s45
      %51 = dma.hbm_to_vmem [thread:$0]  %s2, 512, %s46, [#allocation6], 128, 128, 8
    $region13: #{tpu_custom_call.1} parent=1 // pred_fallthru
      _
    // Predicated region
    $region14: #{tpu_custom_call.1} parent=1 // pred_check
      _
    $region15: #{tpu_custom_call.1} parent=1 // pred_check_branch
      %53 = sbr.rel (0) target = $region17
    $region16: #{tpu_custom_call.1} parent=1 // pred_region
      %s55 = ssub.s32 512, 512
      %56 = vsyncadd [#allocation9], %s55
      %s57 = sshll.u32 [#allocation8], 4
      %s58 = int_to_ptr.vmem [resolvable:$true] %s57
      %63 = dma.hbm_to_vmem [thread:$0]  %s3, 512, %s58, [#allocation9], 128, 128, 8
    $region17: #{tpu_custom_call.1} parent=1 // pred_fallthru
      _
    // Predicated region
    $region18: #{tpu_custom_call.1} parent=1 // pred_check
      _
    $region19: #{tpu_custom_call.1} parent=1 // pred_check_branch
      %65 = sbr.rel (0) target = $region21
    $region20: #{tpu_custom_call.1} parent=1 // pred_region
      %s67 = ssub.s32 512, 512
      %68 = vsyncadd [#allocation9], %s67
      %s69 = sshll.u32 [#allocation10], 4
      %s70 = int_to_ptr.vmem [resolvable:$true] %s69
      %75 = dma.hbm_to_vmem [thread:$0]  %s4, 512, %s70, [#allocation9], 128, 128, 8
    $region21: #{tpu_custom_call.1} parent=1 // pred_fallthru
      _
    // Predicated region
    $region22: #{tpu_custom_call.1} parent=1 // pred_check
      _
    $region23: #{tpu_custom_call.1} parent=1 // pred_check_branch
      %77 = sbr.rel (0) target = $region25
    $region24: #{tpu_custom_call.1} parent=1 // pred_region
      _
    $region25: #{tpu_custom_call.1} parent=1 // pred_fallthru
      _
    // Predicated region
    $region26: #{tpu_custom_call.1} parent=1 // pred_check
      _
    $region27: #{tpu_custom_call.1} parent=1 // pred_check_branch
      %79 = sbr.rel (0) target = $region29
    $region28: #{tpu_custom_call.1} parent=1 // pred_region
      _
    $region29: #{tpu_custom_call.1} parent=1 // pred_fallthru
      _
    // Predicated region
    $region30: #{tpu_custom_call.1} parent=1 // pred_check
      _
    $region31: #{tpu_custom_call.1} parent=1 // pred_check_branch
      %81 = sbr.rel (0) target = $region33
    $region32: #{tpu_custom_call.1} parent=1 // pred_region
      %82 = dma.done [#allocation3], 512
    $region33: #{tpu_custom_call.1} parent=1 // pred_fallthru
      _
    // Predicated region
    $region34: #{tpu_custom_call.1} parent=1 // pred_check
      _
    $region35: #{tpu_custom_call.1} parent=1 // pred_check_branch
      %84 = sbr.rel (0) target = $region37
    $region36: #{tpu_custom_call.1} parent=1 // pred_region
      %85 = dma.done [#allocation6], 512
    $region37: #{tpu_custom_call.1} parent=1 // pred_fallthru
      _
    // Predicated region
    $region38: #{tpu_custom_call.1} parent=1 // pred_check
      _
    $region39: #{tpu_custom_call.1} parent=1 // pred_check_branch
      %87 = sbr.rel (0) target = $region41
    $region40: #{tpu_custom_call.1} parent=1 // pred_region
      %88 = dma.done [#allocation6], 512
    $region41: #{tpu_custom_call.1} parent=1 // pred_fallthru
      _
    // Predicated region
    $region42: #{tpu_custom_call.1} parent=1 // pred_check
      _
    $region43: #{tpu_custom_call.1} parent=1 // pred_check_branch
      %90 = sbr.rel (0) target = $region45
    $region44: #{tpu_custom_call.1} parent=1 // pred_region
      %91 = dma.done [#allocation9], 512
    $region45: #{tpu_custom_call.1} parent=1 // pred_fallthru
      _
    // Predicated region
    $region46: #{tpu_custom_call.1} parent=1 // pred_check
      _
    $region47: #{tpu_custom_call.1} parent=1 // pred_check_branch
      %93 = sbr.rel (0) target = $region49
    $region48: #{tpu_custom_call.1} parent=1 // pred_region
      %94 = dma.done [#allocation9], 512
    $region49: #{tpu_custom_call.1} parent=1 // pred_fallthru
      _
    %v95 = vld [vmem:[#allocation8] sm:$0xff]
    %v96 = vld [vmem:[#allocation8 + $0x8] sm:$0xff]
    %v97 = vld [vmem:[#allocation8 + $0x10] sm:$0xff]
    %v98 = vld [vmem:[#allocation8 + $0x18] sm:$0xff]
    %v99 = vld [vmem:[#allocation2] sm:$0xff]
    %v100 = vld [vmem:[#allocation2 + $0x8] sm:$0xff]
    %v101 = vld [vmem:[#allocation2 + $0x10] sm:$0xff]
    %v102 = vld [vmem:[#allocation2 + $0x18] sm:$0xff]
    %vm103 = vcmask 261120
    %v105 = vsel %vm103, %v95, 0
    %v108 = vsel %vm103, %v96, 0
    %v111 = vsel %vm103, %v97, 0
    %v114 = vsel %vm103, %v98, 0
    %116 = vmatprep.subr.mxu0 0.0
    %117 = vmatpush1.msra.mxu0 %v99
    %118 = vmatprep.subr.mxu0 0.0
    %119 = vmatpush1.msra.mxu0 %v100
    %120 = vmatprep.subr.mxu0 0.0
    %121 = vmatpush1.msra.mxu0 %v101
    %122 = vmatprep.subr.mxu0 0.0
    %123 = vmatpush1.msra.mxu0 %v102
    %124 = vmatprep.subr.mxu0 0.0
    %125 = vmatpush1.msra.mxu0 0.0
    %126 = vmatprep.subr.mxu0 0.0
    %127 = vmatpush1.msra.mxu0 0.0
    %128 = vmatprep.subr.mxu0 0.0
    %129 = vmatpush1.msra.mxu0 0.0
    %130 = vmatprep.subr.mxu0 0.0
    %131 = vmatpush1.msra.mxu0 0.0
    %132 = vmatprep.subr.mxu0 0.0
    %133 = vmatpush1.msra.mxu0 0.0
    %134 = vmatprep.subr.mxu0 0.0
    %135 = vmatpush1.msra.mxu0 0.0
    %136 = vmatprep.subr.mxu0 0.0
    %137 = vmatpush1.msra.mxu0 0.0
    %138 = vmatprep.subr.mxu0 0.0
    %139 = vmatpush1.msra.mxu0 0.0
    %140 = vmatprep.subr.mxu0 0.0
    %141 = vmatpush1.msra.mxu0 0.0
    %142 = vmatprep.subr.mxu0 0.0
    %143 = vmatpush1.msra.mxu0 0.0
    %144 = vmatprep.subr.mxu0 0.0
    %145 = vmatpush1.msra.mxu0 0.0
    %146 = vmatprep.subr.mxu0 0.0
    %147 = vmatpush1.msra.mxu0 0.0
    %148 = vmatprep.subr.mxu0 0.0
    %149 = vmatpush1.msra.mxu0 0.0
    %150 = vmatprep.subr.mxu0 0.0
    %151 = vmatpush1.msra.mxu0 0.0
    %152 = vmatprep.subr.mxu0 0.0
    %153 = vmatpush1.msra.mxu0 0.0
    %154 = vmatprep.subr.mxu0 0.0
    %155 = vmatpush1.msra.mxu0 0.0
    %156 = vmatprep.subr.mxu0 0.0
    %157 = vmatpush1.msra.mxu0 0.0
    %158 = vmatprep.subr.mxu0 0.0
    %159 = vmatpush1.msra.mxu0 0.0
    %160 = vmatprep.subr.mxu0 0.0
    %161 = vmatpush1.msra.mxu0 0.0
    %162 = vmatprep.subr.mxu0 0.0
    %163 = vmatpush1.msra.mxu0 0.0
    %164 = vmatprep.subr.mxu0 0.0
    %165 = vmatpush1.msra.mxu0 0.0
    %166 = vmatprep.subr.mxu0 0.0
    %167 = vmatpush1.msra.mxu0 0.0
    %168 = vmatprep.subr.mxu0 0.0
    %169 = vmatpush1.msra.mxu0 0.0
    %170 = vmatprep.subr.mxu0 0.0
    %171 = vmatpush1.msra.mxu0 0.0
    %172 = vmatprep.subr.mxu0 0.0
    %173 = vmatpush1.msra.mxu0 0.0
    %174 = vmatprep.subr.mxu0 0.0
    %175 = vmatpush1.msra.mxu0 0.0
    %176 = vmatprep.subr.mxu0 0.0
    %177 = vmatpush1.msra.mxu0 0.0
    %178 = vmatprep.subr.mxu0 0.0
    %179 = vmatpush1.msra.mxu0 0.0
    %180 = vmatprep.mubr.f32.mxu0 0.0
    %181 = vmatmul.mubr.f32.gmra.mrb[0].mxu0 %v105
    %v182 = vpop.f32.mrb[0].mxu0
    %v183 = vadd.f32 0.0, %v182
    %v184 = vpop.f32.mrb[0].mxu0
    %185 = vmatprep.mubr.f32.mxu0 0.0
    %186 = vmatmul.mubr.f32.gmra.mrb[0].mxu0 %v108
    %v187 = vpop.f32.mrb[0].mxu0
    %v188 = vadd.f32 0.0, %v187
    %v189 = vpop.f32.mrb[0].mxu0
    %190 = vmatprep.mubr.f32.mxu0 0.0
    %191 = vmatmul.mubr.f32.gmra.mrb[0].mxu0 %v111
    %v192 = vpop.f32.mrb[0].mxu0
    %v193 = vadd.f32 0.0, %v192
    %v194 = vpop.f32.mrb[0].mxu0
    %195 = vmatprep.mubr.f32.mxu0 0.0
    %196 = vmatmul.mubr.f32.gmra.mrb[0].mxu0 %v114
    %v197 = vpop.f32.mrb[0].mxu0
    %v198 = vadd.f32 0.0, %v197
    %v199 = vpop.f32.mrb[0].mxu0
    %200 = vdwg.mxu0
    %v201 = vld [vmem:[#allocation10] sm:$0xff]
    %v202 = vld [vmem:[#allocation10 + $0x8] sm:$0xff]
    %v203 = vld [vmem:[#allocation10 + $0x10] sm:$0xff]
    %v204 = vld [vmem:[#allocation10 + $0x18] sm:$0xff]
    %v205 = vld [vmem:[#allocation7] sm:$0xff]
    %v206 = vld [vmem:[#allocation7 + $0x8] sm:$0xff]
    %v207 = vld [vmem:[#allocation7 + $0x10] sm:$0xff]
    %v208 = vld [vmem:[#allocation7 + $0x18] sm:$0xff]
    %v210 = vsel %vm103, %v201, 0
    %v213 = vsel %vm103, %v202, 0
    %v216 = vsel %vm103, %v203, 0
    %v219 = vsel %vm103, %v204, 0
    %221 = vmatprep.subr.mxu0 0.0
    %222 = vmatpush1.msra.mxu0 %v205
    %223 = vmatprep.subr.mxu0 0.0
    %224 = vmatpush1.msra.mxu0 %v206
    %225 = vmatprep.subr.mxu0 0.0
    %226 = vmatpush1.msra.mxu0 %v207
    %227 = vmatprep.subr.mxu0 0.0
    %228 = vmatpush1.msra.mxu0 %v208
    %229 = vmatprep.subr.mxu0 0.0
    %230 = vmatpush1.msra.mxu0 0.0
    %231 = vmatprep.subr.mxu0 0.0
    %232 = vmatpush1.msra.mxu0 0.0
    %233 = vmatprep.subr.mxu0 0.0
    %234 = vmatpush1.msra.mxu0 0.0
    %235 = vmatprep.subr.mxu0 0.0
    %236 = vmatpush1.msra.mxu0 0.0
    %237 = vmatprep.subr.mxu0 0.0
    %238 = vmatpush1.msra.mxu0 0.0
    %239 = vmatprep.subr.mxu0 0.0
    %240 = vmatpush1.msra.mxu0 0.0
    %241 = vmatprep.subr.mxu0 0.0
    %242 = vmatpush1.msra.mxu0 0.0
    %243 = vmatprep.subr.mxu0 0.0
    %244 = vmatpush1.msra.mxu0 0.0
    %245 = vmatprep.subr.mxu0 0.0
    %246 = vmatpush1.msra.mxu0 0.0
    %247 = vmatprep.subr.mxu0 0.0
    %248 = vmatpush1.msra.mxu0 0.0
    %249 = vmatprep.subr.mxu0 0.0
    %250 = vmatpush1.msra.mxu0 0.0
    %251 = vmatprep.subr.mxu0 0.0
    %252 = vmatpush1.msra.mxu0 0.0
    %253 = vmatprep.subr.mxu0 0.0
    %254 = vmatpush1.msra.mxu0 0.0
    %255 = vmatprep.subr.mxu0 0.0
    %256 = vmatpush1.msra.mxu0 0.0
    %257 = vmatprep.subr.mxu0 0.0
    %258 = vmatpush1.msra.mxu0 0.0
    %259 = vmatprep.subr.mxu0 0.0
    %260 = vmatpush1.msra.mxu0 0.0
    %261 = vmatprep.subr.mxu0 0.0
    %262 = vmatpush1.msra.mxu0 0.0
    %263 = vmatprep.subr.mxu0 0.0
    %264 = vmatpush1.msra.mxu0 0.0
    %265 = vmatprep.subr.mxu0 0.0
    %266 = vmatpush1.msra.mxu0 0.0
    %267 = vmatprep.subr.mxu0 0.0
    %268 = vmatpush1.msra.mxu0 0.0
    %269 = vmatprep.subr.mxu0 0.0
    %270 = vmatpush1.msra.mxu0 0.0
    %271 = vmatprep.subr.mxu0 0.0
    %272 = vmatpush1.msra.mxu0 0.0
    %273 = vmatprep.subr.mxu0 0.0
    %274 = vmatpush1.msra.mxu0 0.0
    %275 = vmatprep.subr.mxu0 0.0
    %276 = vmatpush1.msra.mxu0 0.0
    %277 = vmatprep.subr.mxu0 0.0
    %278 = vmatpush1.msra.mxu0 0.0
    %279 = vmatprep.subr.mxu0 0.0
    %280 = vmatpush1.msra.mxu0 0.0
    %281 = vmatprep.subr.mxu0 0.0
    %282 = vmatpush1.msra.mxu0 0.0
    %283 = vmatprep.subr.mxu0 0.0
    %284 = vmatpush1.msra.mxu0 0.0
    %285 = vmatprep.mubr.f32.mxu0 0.0
    %286 = vmatmul.mubr.f32.gmra.mrb[0].mxu0 %v210
    %v287 = vpop.f32.mrb[0].mxu0
    %v288 = vadd.f32 0.0, %v287
    %v289 = vpop.f32.mrb[0].mxu0
    %290 = vmatprep.mubr.f32.mxu0 0.0
    %291 = vmatmul.mubr.f32.gmra.mrb[0].mxu0 %v213
    %v292 = vpop.f32.mrb[0].mxu0
    %v293 = vadd.f32 0.0, %v292
    %v294 = vpop.f32.mrb[0].mxu0
    %295 = vmatprep.mubr.f32.mxu0 0.0
    %296 = vmatmul.mubr.f32.gmra.mrb[0].mxu0 %v216
    %v297 = vpop.f32.mrb[0].mxu0
    %v298 = vadd.f32 0.0, %v297
    %v299 = vpop.f32.mrb[0].mxu0
    %300 = vmatprep.mubr.f32.mxu0 0.0
    %301 = vmatmul.mubr.f32.gmra.mrb[0].mxu0 %v219
    %v302 = vpop.f32.mrb[0].mxu0
    %v303 = vadd.f32 0.0, %v302
    %v304 = vpop.f32.mrb[0].mxu0
    %305 = vdwg.mxu0
    %v306 = vld [vmem:[#allocation5] sm:$0xff]
    %v307 = vld [vmem:[#allocation5 + $0x8] sm:$0xff]
    %v308 = vld [vmem:[#allocation5 + $0x10] sm:$0xff]
    %v309 = vld [vmem:[#allocation5 + $0x18] sm:$0xff]
    %v310 = vmul.f32 %v183, %v306
    %v311 = vmul.f32 %v188, %v307
    %v312 = vmul.f32 %v193, %v308
    %v313 = vmul.f32 %v198, %v309
    %v314 = vmul.f32 %v310, %v288
    %v315 = vmul.f32 %v311, %v293
    %v316 = vmul.f32 %v312, %v298
    %v317 = vmul.f32 %v313, %v303
    %v318 = vadd.f32 %v314, %v315
    %v319 = vadd.f32 %v318, %v316
    %v320 = vadd.f32 %v319, %v317
    %v321 = vrot.slane %v320, 4
    %v322 = vadd.f32 %v320, %v321
    %v323 = vrot.slane %v322, 2
    %v324 = vadd.f32 %v322, %v323
    %v325 = vrot.slane %v324, 1
    %v326 = vadd.f32 %v324, %v325
    %v327 = vld [vmem:[%s5] sm:$0x1]
    %v328 = vadd.f32 %v326, %v327
    %v329 = vld [vmem:[%s6] sm:$0x1]
    %v330 = vlog2.pop %v329
    %v331 = vmul.f32 %v330, 0.6931472
    %v332 = vsub.f32 0.0, %v328
    %v333 = vmul.f32 %v332, 1.442695
    %v334 = vpow.pop %v333
    %v335 = vadd.f32 %v334, 1.0
    %v336 = vmul.f32 %v331, %v335
    %337 = vst [vmem:[#allocation11] sm:$0x1] %v336
    // Predicated region
    $region50: #{tpu_custom_call.1} parent=1 // pred_check
      _
    $region51: #{tpu_custom_call.1} parent=1 // pred_check_branch
      %339 = sbr.rel (0) target = $region53
    $region52: #{tpu_custom_call.1} parent=1 // pred_region
      %s341 = ssub.s32 16, 16
      %342 = vsyncadd [#allocation4], %s341
      %s344 = sshll.u32 [#allocation11], 4
      %s345 = int_to_ptr.vmem [resolvable:$true] %s344
      %347 = dma.vmem_to_hbm [thread:$0]  %s345, 16, %s7, [#allocation4]
    $region53: #{tpu_custom_call.1} parent=1 // pred_fallthru
      _
    // Predicated region
    $region54: #{tpu_custom_call.1} parent=1 // pred_check
      _
    $region55: #{tpu_custom_call.1} parent=1 // pred_check_branch
      %349 = sbr.rel (0) target = $region57
    $region56: #{tpu_custom_call.1} parent=1 // pred_region
      %350 = dma.done [#allocation4], 16
    $region57: #{tpu_custom_call.1} parent=1 // pred_fallthru
      _
    %351 = vsyncpa [#allocation3], 1
    %352 = vsyncpa [#allocation6], 1
    %353 = vsyncpa [#allocation9], 1
    %354 = vsyncpa [#allocation4], 1

</llo_original>
